<compile_context>
chip_gen: v5e
topology: v5e:2x2
jax: 0.10.0
libtpu: 0.0.40
codegen_flags: <defaults>
</compile_context>

<pallas_src>
import jax
import jax.numpy as jnp
from jax import lax
from jax.experimental import pallas as pl
from jax.experimental.pallas import tpu as pltpu

TGROUP = 8  # time steps per group; matches the 8-sublane int32 tile


def _hmm_alpha_kernel(x_ref, emit_ref, trans_p_ref, prior_ref, tm1_ref, out_ref):
    """HMM forward (alpha) recursion in the log domain, states x batch layout.

    x_ref       : (n_groups, TGROUP*B_tile) int32  group-major, lane-dense obs
                  column s*B_tile + j of group g = x[batch j, t = g*TGROUP + s]
    emit_ref    : (N, M)  f32   log emission matrix (row log_softmax)
    trans_p_ref : (N, N)  f32   exp(log transition matrix) (column-normalized)
    prior_ref   : (N, 1)  f32   log state priors
    tm1_ref     : (1, B_tile) int32   T - 1 per sequence in this batch tile
    out_ref     : (1, B_tile) f32     log p(x_b) = logsumexp_i alpha[T_b-1, i, b]
    """
    n_groups, group_w = x_ref.shape
    n_states, n_symbols = emit_ref.shape
    b_tile = group_w // TGROUP

    # Hoisted loop invariants (JAX does not CSE these inside loops).
    emit = emit_ref[...]                                             # (N, M)
    trans_p = trans_p_ref[...]                                       # (N, N)
    prior = prior_ref[...]                                           # (N, 1)
    tm1 = tm1_ref[...]                                               # (1, B_tile)
    sym_iota = lax.broadcasted_iota(jnp.int32, (n_symbols, TGROUP * b_tile), 0)

    def group_emissions(xg):
        # One wide MXU matmul produces all 8 steps' emissions for this group:
        #   em[i, s*B_tile + j] = log_emit[i, x[t0+s, j]]
        one_hot = (sym_iota == xg).astype(jnp.float32)               # (M, 8*B_tile)
        return jnp.dot(emit, one_hot, preferred_element_type=jnp.float32)

    def transition(alpha):
        # logsumexp_j(log_A[i,j] + alpha[j,b]) via max-shifted exp-space matmul.
        m = jnp.max(alpha, axis=0, keepdims=True)                    # (1, B_tile)
        ea = jnp.exp(alpha - m)                                      # (N, B_tile)
        y = jnp.dot(trans_p, ea, preferred_element_type=jnp.float32)
        return jnp.log(y) + m

    def run_group(g, alpha, sel, first_group):
        xg = x_ref[pl.ds(g, 1), :]                                   # (1, 8*B_tile)
        em_g = group_emissions(xg)                                   # (N, 8*B_tile)
        t0 = g * TGROUP
        for s in range(TGROUP):                                      # static unroll
            em_s = em_g[:, s * b_tile:(s + 1) * b_tile]              # 128-aligned
            if first_group and s == 0:
                alpha = em_s + prior                                 # t = 0
            else:
                alpha = em_s + transition(alpha)
            # Capture alpha at each sequence's final valid timestep only.
            sel = jnp.where(tm1 == t0 + s, alpha, sel)
        return alpha, sel

    zeros = jnp.zeros((n_states, b_tile), jnp.float32)
    alpha, sel = run_group(0, zeros, zeros, True)                    # peeled group 0

    if n_groups > 1:
        def body(g, carry):
            a, s_ = carry
            return run_group(g, a, s_, False)
        unroll = True if (n_groups - 1) <= 4 else 2
        alpha, sel = lax.fori_loop(1, n_groups, body, (alpha, sel), unroll=unroll)

    # Final logsumexp over states for the selected timestep -> (1, B_tile).
    m = jnp.max(sel, axis=0, keepdims=True)
    out_ref[...] = m + jnp.log(jnp.sum(jnp.exp(sel - m), axis=0, keepdims=True))


def hmm_forward(x, T, unnorm_priors, unnorm_trans, unnorm_emit, *, b_tile=None):
    """Equivalent of HMM.forward(x, T) from the PyTorch module.

    x : int (B, T_max)   discrete observations in [0, M)
    T : int (B,)         sequence lengths (assumed >= 1, <= T_max)
    returns log_probs : float32 (B, 1)
    """
    batch, t_max = x.shape
    n_states, n_symbols = unnorm_emit.shape

    # Parameter normalization (matches torch.nn.functional.log_softmax).
    log_priors = jax.nn.log_softmax(unnorm_priors, axis=0)           # (N,)
    log_trans = jax.nn.log_softmax(unnorm_trans, axis=0)             # (N, N) cols
    log_emit = jax.nn.log_softmax(unnorm_emit, axis=1)               # (N, M) rows

    # Lane-aligned batch tile (>= 128; wider tiles keep the MXU busy).
    if b_tile is None:
        if batch <= 128:
            b_tile = 128
        elif batch <= 512:
            b_tile = 256
        else:
            b_tile = 512
    b_pad = -(-batch // b_tile) * b_tile
    n_b_tiles = b_pad // b_tile

    t_pad = -(-t_max // TGROUP) * TGROUP
    n_groups = t_pad // TGROUP

    # Pad x with symbol 0 and T-1 with 0; padded steps / columns are never
    # selected (tm1 < true T_max) or are sliced away from the output.
    x_p = jnp.zeros((b_pad, t_pad), jnp.int32).at[:batch, :t_max].set(
        x.astype(jnp.int32))
    tm1 = jnp.zeros((b_pad,), jnp.int32).at[:batch].set(T.astype(jnp.int32) - 1)
    tm1 = tm1.reshape(1, b_pad)

    # Group-major, lane-dense observation layout:
    #   x_grp[bi, g, s*b_tile + j] = x[bi*b_tile + j, g*TGROUP + s]
    x_grp = (x_p.reshape(n_b_tiles, b_tile, n_groups, TGROUP)
                 .transpose(0, 2, 3, 1)
                 .reshape(n_b_tiles, n_groups, TGROUP * b_tile))

    prior_col = log_priors.reshape(n_states, 1).astype(jnp.float32)  # (N, 1)
    trans_p = jnp.exp(log_trans).astype(jnp.float32)                 # (N, N)
    emit = log_emit.astype(jnp.float32)                              # (N, M)

    out = pl.pallas_call(
        _hmm_alpha_kernel,
        out_shape=jax.ShapeDtypeStruct((1, b_pad), jnp.float32),
        grid_spec=pltpu.PrefetchScalarGridSpec(
            num_scalar_prefetch=0,
            grid=(n_b_tiles,),
            in_specs=[
                # Observations: one batch tile, all time groups.
                pl.BlockSpec((pl.Squeezed(), n_groups, TGROUP * b_tile),
                             lambda bi: (bi, 0, 0)),
                # Parameters: replicated (resident) across the batch grid.
                pl.BlockSpec((n_states, n_symbols), lambda bi: (0, 0)),
                pl.BlockSpec((n_states, n_states), lambda bi: (0, 0)),
                pl.BlockSpec((n_states, 1), lambda bi: (0, 0)),
                # T - 1, tiled by batch.
                pl.BlockSpec((1, b_tile), lambda bi: (0, bi)),
            ],
            out_specs=pl.BlockSpec((1, b_tile), lambda bi: (0, bi)),
        ),
        compiler_params=pltpu.CompilerParams(
            # Batch tiles are independent -> megacore sharding on v7x.
            dimension_semantics=("parallel",)),
    )(x_grp, emit, trans_p, prior_col, tm1)

    return out.reshape(b_pad)[:batch].reshape(batch, 1)              # (B, 1)


def hmm_forward_reference(x, T, unnorm_priors, unnorm_trans, unnorm_emit):
    """Pure-JAX reference mirroring the PyTorch loop, for correctness check."""
    batch, t_max = x.shape
    log_priors = jax.nn.log_softmax(unnorm_priors, axis=0)
    log_trans = jax.nn.log_softmax(unnorm_trans, axis=0)
    log_emit = jax.nn.log_softmax(unnorm_emit, axis=1)

    def emission(x_t):  # (B,) -> (B, N)
        return log_emit[:, x_t].T

    log_alpha = [emission(x[:, 0]) + log_priors[None, :]]
    for t in range(1, t_max):
        prev = log_alpha[-1]                                         # (B, N)
        s = log_trans[None, :, :] + prev[:, None, :]                 # (B, N, N)
        trans_out = jax.scipy.special.logsumexp(s, axis=2)           # (B, N)
        log_alpha.append(emission(x[:, t]) + trans_out)
    log_alpha = jnp.stack(log_alpha, axis=1)                         # (B, T_max, N)
    log_sums = jax.scipy.special.logsumexp(log_alpha, axis=2)        # (B, T_max)
    return jnp.take_along_axis(log_sums, (T - 1).reshape(-1, 1), axis=1)


if __name__ == "__main__":
    # Small shapes: B=2 sequences, T_max=8 timesteps, N=32 states, M=16 symbols.
    B, T_MAX, N, M = 2, 8, 32, 16

    key = jax.random.PRNGKey(0)
    k_pri, k_trans, k_emit, k_x = jax.random.split(key, 4)

    unnorm_priors = jax.random.normal(k_pri, (N,), dtype=jnp.float32)
    unnorm_trans = jax.random.normal(k_trans, (N, N), dtype=jnp.float32)
    unnorm_emit = jax.random.normal(k_emit, (N, M), dtype=jnp.float32)

    x = jax.random.randint(k_x, (B, T_MAX), 0, M, dtype=jnp.int32)
    T = jnp.array([T_MAX, T_MAX - 3], dtype=jnp.int32)

    log_probs = hmm_forward(x, T, unnorm_priors, unnorm_trans, unnorm_emit)
    log_probs = jax.block_until_ready(log_probs)

    ref = hmm_forward_reference(x, T, unnorm_priors, unnorm_trans, unnorm_emit)
    assert log_probs.shape == (B, 1)
    assert jnp.allclose(log_probs, ref, atol=1e-4, rtol=1e-4), (log_probs, ref)

    print("KERNEL_OK")
</pallas_src>

<mosaic_0001>
module attributes {stable_mosaic.version = 11 : i64} {
  func.func @_hmm_alpha_kernel(%arg0: i32, %arg1: memref<1x1x1024xi32, #tpu.memory_space<vmem>>, %arg2: memref<32x16xf32, #tpu.memory_space<vmem>>, %arg3: memref<32x32xf32, #tpu.memory_space<vmem>>, %arg4: memref<32x1xf32, #tpu.memory_space<vmem>>, %arg5: memref<1x128xi32, #tpu.memory_space<vmem>>, %arg6: memref<1x128xf32, #tpu.memory_space<vmem>>) attributes {dimension_semantics = [#tpu.dimension_semantics<parallel>], iteration_bounds = array<i64: 1>, scalar_prefetch = 0 : i64, scratch_operands = 0 : i64, tpu.core_type = #tpu.core_type<tc>, window_params = [{transform_indices = @transform_0, window_bounds = array<i64: 1, 1, 1024>}, {pipeline_mode = #tpu.pipeline_mode<synchronous>, transform_indices = @transform_1, window_bounds = array<i64: 32, 16>}, {pipeline_mode = #tpu.pipeline_mode<synchronous>, transform_indices = @transform_2, window_bounds = array<i64: 32, 32>}, {pipeline_mode = #tpu.pipeline_mode<synchronous>, transform_indices = @transform_3, window_bounds = array<i64: 32, 1>}, {transform_indices = @transform_4, window_bounds = array<i64: 1, 128>}, {transform_indices = @transform_5, window_bounds = array<i64: 1, 128>}]} {
    %c0 = arith.constant 0 : index
    %c0_0 = arith.constant 0 : index
    %0 = vector.load %arg2[%c0, %c0_0] : memref<32x16xf32, #tpu.memory_space<vmem>>, vector<32x16xf32>
    %c0_1 = arith.constant 0 : index
    %c0_2 = arith.constant 0 : index
    %1 = vector.load %arg3[%c0_1, %c0_2] : memref<32x32xf32, #tpu.memory_space<vmem>>, vector<32x32xf32>
    %c0_3 = arith.constant 0 : index
    %c0_4 = arith.constant 0 : index
    %2 = vector.load %arg4[%c0_3, %c0_4] : memref<32x1xf32, #tpu.memory_space<vmem>>, vector<32x1xf32>
    %c0_5 = arith.constant 0 : index
    %c0_6 = arith.constant 0 : index
    %3 = vector.load %arg5[%c0_5, %c0_6] : memref<1x128xi32, #tpu.memory_space<vmem>>, vector<1x128xi32>
    %4 = tpu.iota {dimensions = array<i32: 0>} : vector<16x1024xi32>
    %cst = arith.constant 0.000000e+00 : f32
    %5 = vector.broadcast %cst : f32 to vector<32x128xf32>
    %c0_7 = arith.constant 0 : index
    %c0_8 = arith.constant 0 : index
    %c0_9 = arith.constant 0 : index
    %6 = vector.load %arg1[%c0_7, %c0_8, %c0_9] : memref<1x1x1024xi32, #tpu.memory_space<vmem>>, vector<1x1x1024xi32>
    %7 = vector.shape_cast %6 : vector<1x1x1024xi32> to vector<1x1024xi32>
    %8 = vector.broadcast %7 : vector<1x1024xi32> to vector<16x1024xi32>
    %9 = arith.cmpi eq, %4, %8 : vector<16x1024xi32>
    %10 = arith.extui %9 : vector<16x1024xi1> to vector<16x1024xi32>
    %11 = arith.sitofp %10 : vector<16x1024xi32> to vector<16x1024xf32>
    %cst_10 = arith.constant dense<0.000000e+00> : vector<32x1024xf32>
    %12 = tpu.matmul %0, %11, %cst_10 {dimension_numbers = #tpu.dot_dimension_numbers<[1], [0], [0], [1], [0, 0, 1, 1], [], []>} : vector<32x16xf32>, vector<16x1024xf32>, vector<32x1024xf32> -> vector<32x1024xf32>
    %13 = vector.extract_strided_slice %12 {offsets = [0, 0], sizes = [32, 128], strides = [1, 1]} : vector<32x1024xf32> to vector<32x128xf32>
    %14 = vector.broadcast %2 : vector<32x1xf32> to vector<32x128xf32>
    %15 = arith.addf %13, %14 : vector<32x128xf32>
    %c0_i32 = arith.constant 0 : i32
    %16 = vector.broadcast %c0_i32 : i32 to vector<1x128xi32>
    %17 = arith.cmpi eq, %3, %16 : vector<1x128xi32>
    %18 = vector.shape_cast %17 : vector<1x128xi1> to vector<1x128xi1>
    %19 = vector.broadcast %18 : vector<1x128xi1> to vector<32x128xi1>
    %20 = arith.select %19, %15, %5 : vector<32x128xi1>, vector<32x128xf32>
    %21 = vector.extract_strided_slice %12 {offsets = [0, 128], sizes = [32, 128], strides = [1, 1]} : vector<32x1024xf32> to vector<32x128xf32>
    %cst_11 = arith.constant dense<0xFF800000> : vector<128xf32>
    %22 = vector.multi_reduction <maximumf>, %15, %cst_11 [0] : vector<32x128xf32> to vector<128xf32>
    %23 = vector.shape_cast %22 : vector<128xf32> to vector<1x128xf32>
    %24 = vector.broadcast %23 : vector<1x128xf32> to vector<32x128xf32>
    %25 = arith.subf %15, %24 : vector<32x128xf32>
    %26 = math.exp %25 : vector<32x128xf32>
    %cst_12 = arith.constant dense<0.000000e+00> : vector<32x128xf32>
    %27 = tpu.matmul %1, %26, %cst_12 {dimension_numbers = #tpu.dot_dimension_numbers<[1], [0], [0], [1], [0, 0, 1, 1], [], []>} : vector<32x32xf32>, vector<32x128xf32>, vector<32x128xf32> -> vector<32x128xf32>
    %28 = math.log %27 : vector<32x128xf32>
    %29 = vector.broadcast %23 : vector<1x128xf32> to vector<32x128xf32>
    %30 = arith.addf %28, %29 : vector<32x128xf32>
    %31 = arith.addf %21, %30 : vector<32x128xf32>
    %c1_i32 = arith.constant 1 : i32
    %32 = vector.broadcast %c1_i32 : i32 to vector<1x128xi32>
    %33 = arith.cmpi eq, %3, %32 : vector<1x128xi32>
    %34 = vector.shape_cast %33 : vector<1x128xi1> to vector<1x128xi1>
    %35 = vector.broadcast %34 : vector<1x128xi1> to vector<32x128xi1>
    %36 = arith.select %35, %31, %20 : vector<32x128xi1>, vector<32x128xf32>
    %37 = vector.extract_strided_slice %12 {offsets = [0, 256], sizes = [32, 128], strides = [1, 1]} : vector<32x1024xf32> to vector<32x128xf32>
    %cst_13 = arith.constant dense<0xFF800000> : vector<128xf32>
    %38 = vector.multi_reduction <maximumf>, %31, %cst_13 [0] : vector<32x128xf32> to vector<128xf32>
    %39 = vector.shape_cast %38 : vector<128xf32> to vector<1x128xf32>
    %40 = vector.broadcast %39 : vector<1x128xf32> to vector<32x128xf32>
    %41 = arith.subf %31, %40 : vector<32x128xf32>
    %42 = math.exp %41 : vector<32x128xf32>
    %cst_14 = arith.constant dense<0.000000e+00> : vector<32x128xf32>
    %43 = tpu.matmul %1, %42, %cst_14 {dimension_numbers = #tpu.dot_dimension_numbers<[1], [0], [0], [1], [0, 0, 1, 1], [], []>} : vector<32x32xf32>, vector<32x128xf32>, vector<32x128xf32> -> vector<32x128xf32>
    %44 = math.log %43 : vector<32x128xf32>
    %45 = vector.broadcast %39 : vector<1x128xf32> to vector<32x128xf32>
    %46 = arith.addf %44, %45 : vector<32x128xf32>
    %47 = arith.addf %37, %46 : vector<32x128xf32>
    %c2_i32 = arith.constant 2 : i32
    %48 = vector.broadcast %c2_i32 : i32 to vector<1x128xi32>
    %49 = arith.cmpi eq, %3, %48 : vector<1x128xi32>
    %50 = vector.shape_cast %49 : vector<1x128xi1> to vector<1x128xi1>
    %51 = vector.broadcast %50 : vector<1x128xi1> to vector<32x128xi1>
    %52 = arith.select %51, %47, %36 : vector<32x128xi1>, vector<32x128xf32>
    %53 = vector.extract_strided_slice %12 {offsets = [0, 384], sizes = [32, 128], strides = [1, 1]} : vector<32x1024xf32> to vector<32x128xf32>
    %cst_15 = arith.constant dense<0xFF800000> : vector<128xf32>
    %54 = vector.multi_reduction <maximumf>, %47, %cst_15 [0] : vector<32x128xf32> to vector<128xf32>
    %55 = vector.shape_cast %54 : vector<128xf32> to vector<1x128xf32>
    %56 = vector.broadcast %55 : vector<1x128xf32> to vector<32x128xf32>
    %57 = arith.subf %47, %56 : vector<32x128xf32>
    %58 = math.exp %57 : vector<32x128xf32>
    %cst_16 = arith.constant dense<0.000000e+00> : vector<32x128xf32>
    %59 = tpu.matmul %1, %58, %cst_16 {dimension_numbers = #tpu.dot_dimension_numbers<[1], [0], [0], [1], [0, 0, 1, 1], [], []>} : vector<32x32xf32>, vector<32x128xf32>, vector<32x128xf32> -> vector<32x128xf32>
    %60 = math.log %59 : vector<32x128xf32>
    %61 = vector.broadcast %55 : vector<1x128xf32> to vector<32x128xf32>
    %62 = arith.addf %60, %61 : vector<32x128xf32>
    %63 = arith.addf %53, %62 : vector<32x128xf32>
    %c3_i32 = arith.constant 3 : i32
    %64 = vector.broadcast %c3_i32 : i32 to vector<1x128xi32>
    %65 = arith.cmpi eq, %3, %64 : vector<1x128xi32>
    %66 = vector.shape_cast %65 : vector<1x128xi1> to vector<1x128xi1>
    %67 = vector.broadcast %66 : vector<1x128xi1> to vector<32x128xi1>
    %68 = arith.select %67, %63, %52 : vector<32x128xi1>, vector<32x128xf32>
    %69 = vector.extract_strided_slice %12 {offsets = [0, 512], sizes = [32, 128], strides = [1, 1]} : vector<32x1024xf32> to vector<32x128xf32>
    %cst_17 = arith.constant dense<0xFF800000> : vector<128xf32>
    %70 = vector.multi_reduction <maximumf>, %63, %cst_17 [0] : vector<32x128xf32> to vector<128xf32>
    %71 = vector.shape_cast %70 : vector<128xf32> to vector<1x128xf32>
    %72 = vector.broadcast %71 : vector<1x128xf32> to vector<32x128xf32>
    %73 = arith.subf %63, %72 : vector<32x128xf32>
    %74 = math.exp %73 : vector<32x128xf32>
    %cst_18 = arith.constant dense<0.000000e+00> : vector<32x128xf32>
    %75 = tpu.matmul %1, %74, %cst_18 {dimension_numbers = #tpu.dot_dimension_numbers<[1], [0], [0], [1], [0, 0, 1, 1], [], []>} : vector<32x32xf32>, vector<32x128xf32>, vector<32x128xf32> -> vector<32x128xf32>
    %76 = math.log %75 : vector<32x128xf32>
    %77 = vector.broadcast %71 : vector<1x128xf32> to vector<32x128xf32>
    %78 = arith.addf %76, %77 : vector<32x128xf32>
    %79 = arith.addf %69, %78 : vector<32x128xf32>
    %c4_i32 = arith.constant 4 : i32
    %80 = vector.broadcast %c4_i32 : i32 to vector<1x128xi32>
    %81 = arith.cmpi eq, %3, %80 : vector<1x128xi32>
    %82 = vector.shape_cast %81 : vector<1x128xi1> to vector<1x128xi1>
    %83 = vector.broadcast %82 : vector<1x128xi1> to vector<32x128xi1>
    %84 = arith.select %83, %79, %68 : vector<32x128xi1>, vector<32x128xf32>
    %85 = vector.extract_strided_slice %12 {offsets = [0, 640], sizes = [32, 128], strides = [1, 1]} : vector<32x1024xf32> to vector<32x128xf32>
    %cst_19 = arith.constant dense<0xFF800000> : vector<128xf32>
    %86 = vector.multi_reduction <maximumf>, %79, %cst_19 [0] : vector<32x128xf32> to vector<128xf32>
    %87 = vector.shape_cast %86 : vector<128xf32> to vector<1x128xf32>
    %88 = vector.broadcast %87 : vector<1x128xf32> to vector<32x128xf32>
    %89 = arith.subf %79, %88 : vector<32x128xf32>
    %90 = math.exp %89 : vector<32x128xf32>
    %cst_20 = arith.constant dense<0.000000e+00> : vector<32x128xf32>
    %91 = tpu.matmul %1, %90, %cst_20 {dimension_numbers = #tpu.dot_dimension_numbers<[1], [0], [0], [1], [0, 0, 1, 1], [], []>} : vector<32x32xf32>, vector<32x128xf32>, vector<32x128xf32> -> vector<32x128xf32>
    %92 = math.log %91 : vector<32x128xf32>
    %93 = vector.broadcast %87 : vector<1x128xf32> to vector<32x128xf32>
    %94 = arith.addf %92, %93 : vector<32x128xf32>
    %95 = arith.addf %85, %94 : vector<32x128xf32>
    %c5_i32 = arith.constant 5 : i32
    %96 = vector.broadcast %c5_i32 : i32 to vector<1x128xi32>
    %97 = arith.cmpi eq, %3, %96 : vector<1x128xi32>
    %98 = vector.shape_cast %97 : vector<1x128xi1> to vector<1x128xi1>
    %99 = vector.broadcast %98 : vector<1x128xi1> to vector<32x128xi1>
    %100 = arith.select %99, %95, %84 : vector<32x128xi1>, vector<32x128xf32>
    %101 = vector.extract_strided_slice %12 {offsets = [0, 768], sizes = [32, 128], strides = [1, 1]} : vector<32x1024xf32> to vector<32x128xf32>
    %cst_21 = arith.constant dense<0xFF800000> : vector<128xf32>
    %102 = vector.multi_reduction <maximumf>, %95, %cst_21 [0] : vector<32x128xf32> to vector<128xf32>
    %103 = vector.shape_cast %102 : vector<128xf32> to vector<1x128xf32>
    %104 = vector.broadcast %103 : vector<1x128xf32> to vector<32x128xf32>
    %105 = arith.subf %95, %104 : vector<32x128xf32>
    %106 = math.exp %105 : vector<32x128xf32>
    %cst_22 = arith.constant dense<0.000000e+00> : vector<32x128xf32>
    %107 = tpu.matmul %1, %106, %cst_22 {dimension_numbers = #tpu.dot_dimension_numbers<[1], [0], [0], [1], [0, 0, 1, 1], [], []>} : vector<32x32xf32>, vector<32x128xf32>, vector<32x128xf32> -> vector<32x128xf32>
    %108 = math.log %107 : vector<32x128xf32>
    %109 = vector.broadcast %103 : vector<1x128xf32> to vector<32x128xf32>
    %110 = arith.addf %108, %109 : vector<32x128xf32>
    %111 = arith.addf %101, %110 : vector<32x128xf32>
    %c6_i32 = arith.constant 6 : i32
    %112 = vector.broadcast %c6_i32 : i32 to vector<1x128xi32>
    %113 = arith.cmpi eq, %3, %112 : vector<1x128xi32>
    %114 = vector.shape_cast %113 : vector<1x128xi1> to vector<1x128xi1>
    %115 = vector.broadcast %114 : vector<1x128xi1> to vector<32x128xi1>
    %116 = arith.select %115, %111, %100 : vector<32x128xi1>, vector<32x128xf32>
    %117 = vector.extract_strided_slice %12 {offsets = [0, 896], sizes = [32, 128], strides = [1, 1]} : vector<32x1024xf32> to vector<32x128xf32>
    %cst_23 = arith.constant dense<0xFF800000> : vector<128xf32>
    %118 = vector.multi_reduction <maximumf>, %111, %cst_23 [0] : vector<32x128xf32> to vector<128xf32>
    %119 = vector.shape_cast %118 : vector<128xf32> to vector<1x128xf32>
    %120 = vector.broadcast %119 : vector<1x128xf32> to vector<32x128xf32>
    %121 = arith.subf %111, %120 : vector<32x128xf32>
    %122 = math.exp %121 : vector<32x128xf32>
    %cst_24 = arith.constant dense<0.000000e+00> : vector<32x128xf32>
    %123 = tpu.matmul %1, %122, %cst_24 {dimension_numbers = #tpu.dot_dimension_numbers<[1], [0], [0], [1], [0, 0, 1, 1], [], []>} : vector<32x32xf32>, vector<32x128xf32>, vector<32x128xf32> -> vector<32x128xf32>
    %124 = math.log %123 : vector<32x128xf32>
    %125 = vector.broadcast %119 : vector<1x128xf32> to vector<32x128xf32>
    %126 = arith.addf %124, %125 : vector<32x128xf32>
    %127 = arith.addf %117, %126 : vector<32x128xf32>
    %c7_i32 = arith.constant 7 : i32
    %128 = vector.broadcast %c7_i32 : i32 to vector<1x128xi32>
    %129 = arith.cmpi eq, %3, %128 : vector<1x128xi32>
    %130 = vector.shape_cast %129 : vector<1x128xi1> to vector<1x128xi1>
    %131 = vector.broadcast %130 : vector<1x128xi1> to vector<32x128xi1>
    %132 = arith.select %131, %127, %116 : vector<32x128xi1>, vector<32x128xf32>
    %cst_25 = arith.constant dense<0xFF800000> : vector<128xf32>
    %133 = vector.multi_reduction <maximumf>, %132, %cst_25 [0] : vector<32x128xf32> to vector<128xf32>
    %134 = vector.shape_cast %133 : vector<128xf32> to vector<1x128xf32>
    %135 = vector.broadcast %134 : vector<1x128xf32> to vector<32x128xf32>
    %136 = arith.subf %132, %135 : vector<32x128xf32>
    %137 = math.exp %136 : vector<32x128xf32>
    %cst_26 = arith.constant dense<0.000000e+00> : vector<128xf32>
    %138 = vector.multi_reduction <add>, %137, %cst_26 [0] : vector<32x128xf32> to vector<128xf32>
    %139 = vector.shape_cast %138 : vector<128xf32> to vector<1x128xf32>
    %140 = math.log %139 : vector<1x128xf32>
    %141 = arith.addf %134, %140 : vector<1x128xf32>
    %c0_27 = arith.constant 0 : index
    %c0_28 = arith.constant 0 : index
    %142 = vector.load %arg6[%c0_27, %c0_28] : memref<1x128xf32, #tpu.memory_space<vmem>>, vector<1x128xf32>
    tpu.vector_store %arg6[%c0_27, %c0_28], %141 {strides = array<i32>} : memref<1x128xf32, #tpu.memory_space<vmem>>, vector<1x128xf32>,
    return
  }
  func.func @transform_0(%arg0: i32) -> (i32, i32, i32) {
    %c0_i32 = arith.constant 0 : i32
    %c0_i32_0 = arith.constant 0 : i32
    %c0_i32_1 = arith.constant 0 : i32
    return %arg0, %c0_i32, %c0_i32_0 : i32, i32, i32
  }
  func.func @transform_1(%arg0: i32) -> (i32, i32) {
    %c0_i32 = arith.constant 0 : i32
    %c0_i32_0 = arith.constant 0 : i32
    %c0_i32_1 = arith.constant 0 : i32
    return %c0_i32, %c0_i32_0 : i32, i32
  }
  func.func @transform_2(%arg0: i32) -> (i32, i32) {
    %c0_i32 = arith.constant 0 : i32
    %c0_i32_0 = arith.constant 0 : i32
    %c0_i32_1 = arith.constant 0 : i32
    return %c0_i32, %c0_i32_0 : i32, i32
  }
  func.func @transform_3(%arg0: i32) -> (i32, i32) {
    %c0_i32 = arith.constant 0 : i32
    %c0_i32_0 = arith.constant 0 : i32
    %c0_i32_1 = arith.constant 0 : i32
    return %c0_i32, %c0_i32_0 : i32, i32
  }
  func.func @transform_4(%arg0: i32) -> (i32, i32) {
    %c0_i32 = arith.constant 0 : i32
    %c0_i32_0 = arith.constant 0 : i32
    return %c0_i32, %arg0 : i32, i32
  }
  func.func @transform_5(%arg0: i32) -> (i32, i32) {
    %c0_i32 = arith.constant 0 : i32
    %c0_i32_0 = arith.constant 0 : i32
    return %c0_i32, %arg0 : i32, i32
  }
}

</mosaic_0001>

<llo_original>
// kernel: tpu_custom_call.1
$region0: #{tpu_custom_call.1}
  #allocation0 [shape = 'u32[]', space=smem, size = 0x4, offset = 0x4, fixed_abs, tag = 'smem constant byte address 0x4 - core index']
  #allocation1 [shape = 'u32[72,128]{1,0:T(1,128)}', space=vmem, size = 0x9000, scoped, tag = 'internal scratch']
  %s0 = inlined_call_operand.vmem [shape: s32[1,1,1024], index: 0, kind: input, shape index: {}]
  %s1 = inlined_call_operand.vmem [shape: f32[32,16], index: 1, kind: input, shape index: {}]
  %s2 = inlined_call_operand.vmem [shape: f32[32,32], index: 2, kind: input, shape index: {}]
  %s3 = inlined_call_operand.vmem [shape: f32[32,1], index: 3, kind: input, shape index: {}]
  %s4 = inlined_call_operand.vmem [shape: s32[1,128], index: 4, kind: input, shape index: {}]
  %s5 = inlined_call_operand.hbm [shape: f32[1,128], index: 5, kind: output, shape index: {}]
  %s6 = sld [smem:[#allocation0]]
  $region30: #{tpu_custom_call.1} parent=0
    _
  %s8 = ssub.s32 1, %s6
  %s9 = scalar_select 0, %s8, %s6
  $region1: #{tpu_custom_call.1} parent=0
    #allocation2 [shape = 'u8[512]{0}', space=vmem, size = 0x400, scoped, tag = 'output window, operand 0, single buffered']
    #allocation3 [shape = 's32[1]{0}', space=sflag, size = 0x4, scoped, tag = 'scoped memory for tpu_custom_call.1']
    %10 = vsyncpa [#allocation3], 0
    // Predicated region
    $region2: #{tpu_custom_call.1} parent=1 // pred_check
      _
    $region3: #{tpu_custom_call.1} parent=1 // pred_check_branch
      %12 = sbr.rel (0) target = $region5
    $region4: #{tpu_custom_call.1} parent=1 // pred_region
      _
    $region5: #{tpu_custom_call.1} parent=1 // pred_fallthru
      _
    // Predicated region
    $region6: #{tpu_custom_call.1} parent=1 // pred_check
      _
    $region7: #{tpu_custom_call.1} parent=1 // pred_check_branch
      %14 = sbr.rel (0) target = $region9
    $region8: #{tpu_custom_call.1} parent=1 // pred_region
      _
    $region9: #{tpu_custom_call.1} parent=1 // pred_fallthru
      _
    // Predicated region
    $region10: #{tpu_custom_call.1} parent=1 // pred_check
      _
    $region11: #{tpu_custom_call.1} parent=1 // pred_check_branch
      %16 = sbr.rel (0) target = $region13
    $region12: #{tpu_custom_call.1} parent=1 // pred_region
      _
    $region13: #{tpu_custom_call.1} parent=1 // pred_fallthru
      _
    // Predicated region
    $region14: #{tpu_custom_call.1} parent=1 // pred_check
      _
    $region15: #{tpu_custom_call.1} parent=1 // pred_check_branch
      %18 = sbr.rel (0) target = $region17
    $region16: #{tpu_custom_call.1} parent=1 // pred_region
      _
    $region17: #{tpu_custom_call.1} parent=1 // pred_fallthru
      _
    // Predicated region
    $region18: #{tpu_custom_call.1} parent=1 // pred_check
      _
    $region19: #{tpu_custom_call.1} parent=1 // pred_check_branch
      %20 = sbr.rel (0) target = $region21
    $region20: #{tpu_custom_call.1} parent=1 // pred_region
      _
    $region21: #{tpu_custom_call.1} parent=1 // pred_fallthru
      _
    %v21 = vld [vmem:[%s1] sm:$0xff]
    %v22 = vld [vmem:[%s1 + $0x8] sm:$0xff]
    %v23 = vld [vmem:[%s1 + $0x10] sm:$0xff]
    %v24 = vld [vmem:[%s1 + $0x18] sm:$0xff]
    %v25 = vld [vmem:[%s2] sm:$0xff]
    %v26 = vld [vmem:[%s2 + $0x8] sm:$0xff]
    %v27 = vld [vmem:[%s2 + $0x10] sm:$0xff]
    %v28 = vld [vmem:[%s2 + $0x18] sm:$0xff]
    %v29 = vld [vmem:[%s3] sm:$0xff]
    %v30 = vld [vmem:[%s3 + $0x8] sm:$0xff]
    %v31 = vld [vmem:[%s3 + $0x10] sm:$0xff]
    %v32 = vld [vmem:[%s3 + $0x18] sm:$0xff]
    %v33 = vld [vmem:[%s4] sm:$0x1]
    %v34 = vlaneseq
    %v35 = vshrl.u32 %v34, 7
    %v36 = vadd.s32 %v35, 8
    %v37 = vld [vmem:[%s0] sm:$0xff]
    %v38 = vperm.slane %v37, 0
    %v39 = vperm.slane %v37, 1
    %v40 = vperm.slane %v37, 2
    %v41 = vperm.slane %v37, 3
    %v42 = vperm.slane %v37, 4
    %v43 = vperm.slane %v37, 5
    %v44 = vperm.slane %v37, 6
    %v45 = vperm.slane %v37, 7
    %vm46 = vcmp.eq.s32.totalorder %v35, %v38
    %vm47 = vcmp.eq.s32.totalorder %v35, %v39
    %vm48 = vcmp.eq.s32.totalorder %v35, %v40
    %vm49 = vcmp.eq.s32.totalorder %v35, %v41
    %vm50 = vcmp.eq.s32.totalorder %v35, %v42
    %vm51 = vcmp.eq.s32.totalorder %v35, %v43
    %vm52 = vcmp.eq.s32.totalorder %v35, %v44
    %vm53 = vcmp.eq.s32.totalorder %v35, %v45
    %vm54 = vcmp.eq.s32.totalorder %v36, %v38
    %vm55 = vcmp.eq.s32.totalorder %v36, %v39
    %vm56 = vcmp.eq.s32.totalorder %v36, %v40
    %vm57 = vcmp.eq.s32.totalorder %v36, %v41
    %vm58 = vcmp.eq.s32.totalorder %v36, %v42
    %vm59 = vcmp.eq.s32.totalorder %v36, %v43
    %vm60 = vcmp.eq.s32.totalorder %v36, %v44
    %vm61 = vcmp.eq.s32.totalorder %v36, %v45
    %v62 = vsel %vm46, 1, 0
    %v63 = vsel %vm47, 1, 0
    %v64 = vsel %vm48, 1, 0
    %v65 = vsel %vm49, 1, 0
    %v66 = vsel %vm50, 1, 0
    %v67 = vsel %vm51, 1, 0
    %v68 = vsel %vm52, 1, 0
    %v69 = vsel %vm53, 1, 0
    %v70 = vsel %vm54, 1, 0
    %v71 = vsel %vm55, 1, 0
    %v72 = vsel %vm56, 1, 0
    %v73 = vsel %vm57, 1, 0
    %v74 = vsel %vm58, 1, 0
    %v75 = vsel %vm59, 1, 0
    %v76 = vsel %vm60, 1, 0
    %v77 = vsel %vm61, 1, 0
    %v78 = vcvt.s32.f32 %v62
    %v79 = vcvt.s32.f32 %v63
    %v80 = vcvt.s32.f32 %v64
    %v81 = vcvt.s32.f32 %v65
    %v82 = vcvt.s32.f32 %v66
    %v83 = vcvt.s32.f32 %v67
    %v84 = vcvt.s32.f32 %v68
    %v85 = vcvt.s32.f32 %v69
    %v86 = vcvt.s32.f32 %v70
    %v87 = vcvt.s32.f32 %v71
    %v88 = vcvt.s32.f32 %v72
    %v89 = vcvt.s32.f32 %v73
    %v90 = vcvt.s32.f32 %v74
    %v91 = vcvt.s32.f32 %v75
    %v92 = vcvt.s32.f32 %v76
    %v93 = vcvt.s32.f32 %v77
    %vm94 = vcmask 130048
    %v96 = vsel %vm94, %v21, 0
    %v99 = vsel %vm94, %v22, 0
    %v102 = vsel %vm94, %v23, 0
    %v105 = vsel %vm94, %v24, 0
    %107 = vmatpush.msra.mxu0 0.0
    %108 = vmatpush.msra.mxu0 0.0
    %109 = vmatpush.msra.mxu0 0.0
    %110 = vmatpush.msra.mxu0 0.0
    %111 = vmatpush.msra.mxu0 0.0
    %112 = vmatpush.msra.mxu0 0.0
    %113 = vmatpush.msra.mxu0 0.0
    %114 = vmatpush.msra.mxu0 0.0
    %115 = vmatpush.msra.mxu0 0.0
    %116 = vmatpush.msra.mxu0 0.0
    %117 = vmatpush.msra.mxu0 0.0
    %118 = vmatpush.msra.mxu0 0.0
    %119 = vmatpush.msra.mxu0 0.0
    %120 = vmatpush.msra.mxu0 0.0
    %121 = vmatpush.msra.mxu0 %v86
    %122 = vmatpush.msra.mxu0 %v78
    %123 = vmatmul.f32.gmra.mxu0 %v96
    %v124 = vpop.f32.mrf.mxu0
    %v125 = vadd.f32 0.0, %v124
    %126 = vmatmul.f32.gmra.mxu0 %v99
    %v127 = vpop.f32.mrf.mxu0
    %v128 = vadd.f32 0.0, %v127
    %129 = vmatmul.f32.gmra.mxu0 %v102
    %v130 = vpop.f32.mrf.mxu0
    %v131 = vadd.f32 0.0, %v130
    %132 = vmatmul.f32.gmra.mxu0 %v105
    %v133 = vpop.f32.mrf.mxu0
    %v134 = vadd.f32 0.0, %v133
    %135 = vdwg.mxu0
    %136 = vmatpush.msra.mxu0 0.0
    %137 = vmatpush.msra.mxu0 0.0
    %138 = vmatpush.msra.mxu0 0.0
    %139 = vmatpush.msra.mxu0 0.0
    %140 = vmatpush.msra.mxu0 0.0
    %141 = vmatpush.msra.mxu0 0.0
    %142 = vmatpush.msra.mxu0 0.0
    %143 = vmatpush.msra.mxu0 0.0
    %144 = vmatpush.msra.mxu0 0.0
    %145 = vmatpush.msra.mxu0 0.0
    %146 = vmatpush.msra.mxu0 0.0
    %147 = vmatpush.msra.mxu0 0.0
    %148 = vmatpush.msra.mxu0 0.0
    %149 = vmatpush.msra.mxu0 0.0
    %150 = vmatpush.msra.mxu0 %v87
    %151 = vmatpush.msra.mxu0 %v79
    %152 = vmatmul.f32.gmra.mxu0 %v96
    %v153 = vpop.f32.mrf.mxu0
    %v154 = vadd.f32 0.0, %v153
    %155 = vmatmul.f32.gmra.mxu0 %v99
    %v156 = vpop.f32.mrf.mxu0
    %v157 = vadd.f32 0.0, %v156
    %158 = vmatmul.f32.gmra.mxu0 %v102
    %v159 = vpop.f32.mrf.mxu0
    %v160 = vadd.f32 0.0, %v159
    %161 = vmatmul.f32.gmra.mxu0 %v105
    %v162 = vpop.f32.mrf.mxu0
    %v163 = vadd.f32 0.0, %v162
    %164 = vdwg.mxu0
    %165 = vmatpush.msra.mxu0 0.0
    %166 = vmatpush.msra.mxu0 0.0
    %167 = vmatpush.msra.mxu0 0.0
    %168 = vmatpush.msra.mxu0 0.0
    %169 = vmatpush.msra.mxu0 0.0
    %170 = vmatpush.msra.mxu0 0.0
    %171 = vmatpush.msra.mxu0 0.0
    %172 = vmatpush.msra.mxu0 0.0
    %173 = vmatpush.msra.mxu0 0.0
    %174 = vmatpush.msra.mxu0 0.0
    %175 = vmatpush.msra.mxu0 0.0
    %176 = vmatpush.msra.mxu0 0.0
    %177 = vmatpush.msra.mxu0 0.0
    %178 = vmatpush.msra.mxu0 0.0
    %179 = vmatpush.msra.mxu0 %v88
    %180 = vmatpush.msra.mxu0 %v80
    %181 = vmatmul.f32.gmra.mxu0 %v96
    %v182 = vpop.f32.mrf.mxu0
    %v183 = vadd.f32 0.0, %v182
    %184 = vmatmul.f32.gmra.mxu0 %v99
    %v185 = vpop.f32.mrf.mxu0
    %v186 = vadd.f32 0.0, %v185
    %187 = vmatmul.f32.gmra.mxu0 %v102
    %v188 = vpop.f32.mrf.mxu0
    %v189 = vadd.f32 0.0, %v188
    %190 = vmatmul.f32.gmra.mxu0 %v105
    %v191 = vpop.f32.mrf.mxu0
    %v192 = vadd.f32 0.0, %v191
    %193 = vdwg.mxu0
    %194 = vmatpush.msra.mxu0 0.0
    %195 = vmatpush.msra.mxu0 0.0
    %196 = vmatpush.msra.mxu0 0.0
    %197 = vmatpush.msra.mxu0 0.0
    %198 = vmatpush.msra.mxu0 0.0
    %199 = vmatpush.msra.mxu0 0.0
    %200 = vmatpush.msra.mxu0 0.0
    %201 = vmatpush.msra.mxu0 0.0
    %202 = vmatpush.msra.mxu0 0.0
    %203 = vmatpush.msra.mxu0 0.0
    %204 = vmatpush.msra.mxu0 0.0
    %205 = vmatpush.msra.mxu0 0.0
    %206 = vmatpush.msra.mxu0 0.0
    %207 = vmatpush.msra.mxu0 0.0
    %208 = vmatpush.msra.mxu0 %v89
    %209 = vmatpush.msra.mxu0 %v81
    %210 = vmatmul.f32.gmra.mxu0 %v96
    %v211 = vpop.f32.mrf.mxu0
    %v212 = vadd.f32 0.0, %v211
    %213 = vmatmul.f32.gmra.mxu0 %v99
    %v214 = vpop.f32.mrf.mxu0
    %v215 = vadd.f32 0.0, %v214
    %216 = vmatmul.f32.gmra.mxu0 %v102
    %v217 = vpop.f32.mrf.mxu0
    %v218 = vadd.f32 0.0, %v217
    %219 = vmatmul.f32.gmra.mxu0 %v105
    %v220 = vpop.f32.mrf.mxu0
    %v221 = vadd.f32 0.0, %v220
    %222 = vdwg.mxu0
    %223 = vmatpush.msra.mxu0 0.0
    %224 = vmatpush.msra.mxu0 0.0
    %225 = vmatpush.msra.mxu0 0.0
    %226 = vmatpush.msra.mxu0 0.0
    %227 = vmatpush.msra.mxu0 0.0
    %228 = vmatpush.msra.mxu0 0.0
    %229 = vmatpush.msra.mxu0 0.0
    %230 = vmatpush.msra.mxu0 0.0
    %231 = vmatpush.msra.mxu0 0.0
    %232 = vmatpush.msra.mxu0 0.0
    %233 = vmatpush.msra.mxu0 0.0
    %234 = vmatpush.msra.mxu0 0.0
    %235 = vmatpush.msra.mxu0 0.0
    %236 = vmatpush.msra.mxu0 0.0
    %237 = vmatpush.msra.mxu0 %v90
    %238 = vmatpush.msra.mxu0 %v82
    %239 = vmatmul.f32.gmra.mxu0 %v96
    %v240 = vpop.f32.mrf.mxu0
    %v241 = vadd.f32 0.0, %v240
    %242 = vmatmul.f32.gmra.mxu0 %v99
    %v243 = vpop.f32.mrf.mxu0
    %v244 = vadd.f32 0.0, %v243
    %245 = vmatmul.f32.gmra.mxu0 %v102
    %v246 = vpop.f32.mrf.mxu0
    %v247 = vadd.f32 0.0, %v246
    %248 = vmatmul.f32.gmra.mxu0 %v105
    %v249 = vpop.f32.mrf.mxu0
    %v250 = vadd.f32 0.0, %v249
    %251 = vdwg.mxu0
    %252 = vmatpush.msra.mxu0 0.0
    %253 = vmatpush.msra.mxu0 0.0
    %254 = vmatpush.msra.mxu0 0.0
    %255 = vmatpush.msra.mxu0 0.0
    %256 = vmatpush.msra.mxu0 0.0
    %257 = vmatpush.msra.mxu0 0.0
    %258 = vmatpush.msra.mxu0 0.0
    %259 = vmatpush.msra.mxu0 0.0
    %260 = vmatpush.msra.mxu0 0.0
    %261 = vmatpush.msra.mxu0 0.0
    %262 = vmatpush.msra.mxu0 0.0
    %263 = vmatpush.msra.mxu0 0.0
    %264 = vmatpush.msra.mxu0 0.0
    %265 = vmatpush.msra.mxu0 0.0
    %266 = vmatpush.msra.mxu0 %v91
    %267 = vmatpush.msra.mxu0 %v83
    %268 = vmatmul.f32.gmra.mxu0 %v96
    %v269 = vpop.f32.mrf.mxu0
    %v270 = vadd.f32 0.0, %v269
    %271 = vmatmul.f32.gmra.mxu0 %v99
    %v272 = vpop.f32.mrf.mxu0
    %v273 = vadd.f32 0.0, %v272
    %274 = vmatmul.f32.gmra.mxu0 %v102
    %v275 = vpop.f32.mrf.mxu0
    %v276 = vadd.f32 0.0, %v275
    %277 = vmatmul.f32.gmra.mxu0 %v105
    %v278 = vpop.f32.mrf.mxu0
    %v279 = vadd.f32 0.0, %v278
    %280 = vdwg.mxu0
    %281 = vmatpush.msra.mxu0 0.0
    %282 = vmatpush.msra.mxu0 0.0
    %283 = vmatpush.msra.mxu0 0.0
    %284 = vmatpush.msra.mxu0 0.0
    %285 = vmatpush.msra.mxu0 0.0
    %286 = vmatpush.msra.mxu0 0.0
    %287 = vmatpush.msra.mxu0 0.0
    %288 = vmatpush.msra.mxu0 0.0
    %289 = vmatpush.msra.mxu0 0.0
    %290 = vmatpush.msra.mxu0 0.0
    %291 = vmatpush.msra.mxu0 0.0
    %292 = vmatpush.msra.mxu0 0.0
    %293 = vmatpush.msra.mxu0 0.0
    %294 = vmatpush.msra.mxu0 0.0
    %295 = vmatpush.msra.mxu0 %v92
    %296 = vmatpush.msra.mxu0 %v84
    %297 = vmatmul.f32.gmra.mxu0 %v96
    %v298 = vpop.f32.mrf.mxu0
    %v299 = vadd.f32 0.0, %v298
    %300 = vmatmul.f32.gmra.mxu0 %v99
    %v301 = vpop.f32.mrf.mxu0
    %v302 = vadd.f32 0.0, %v301
    %303 = vmatmul.f32.gmra.mxu0 %v102
    %v304 = vpop.f32.mrf.mxu0
    %v305 = vadd.f32 0.0, %v304
    %306 = vmatmul.f32.gmra.mxu0 %v105
    %v307 = vpop.f32.mrf.mxu0
    %v308 = vadd.f32 0.0, %v307
    %309 = vdwg.mxu0
    %310 = vmatpush.msra.mxu0 0.0
    %311 = vmatpush.msra.mxu0 0.0
    %312 = vmatpush.msra.mxu0 0.0
    %313 = vmatpush.msra.mxu0 0.0
    %314 = vmatpush.msra.mxu0 0.0
    %315 = vmatpush.msra.mxu0 0.0
    %316 = vmatpush.msra.mxu0 0.0
    %317 = vmatpush.msra.mxu0 0.0
    %318 = vmatpush.msra.mxu0 0.0
    %319 = vmatpush.msra.mxu0 0.0
    %320 = vmatpush.msra.mxu0 0.0
    %321 = vmatpush.msra.mxu0 0.0
    %322 = vmatpush.msra.mxu0 0.0
    %323 = vmatpush.msra.mxu0 0.0
    %324 = vmatpush.msra.mxu0 %v93
    %325 = vmatpush.msra.mxu0 %v85
    %326 = vmatmul.f32.gmra.mxu0 %v96
    %v327 = vpop.f32.mrf.mxu0
    %v328 = vadd.f32 0.0, %v327
    %329 = vmatmul.f32.gmra.mxu0 %v99
    %v330 = vpop.f32.mrf.mxu0
    %v331 = vadd.f32 0.0, %v330
    %332 = vmatmul.f32.gmra.mxu0 %v102
    %v333 = vpop.f32.mrf.mxu0
    %v334 = vadd.f32 0.0, %v333
    %335 = vmatmul.f32.gmra.mxu0 %v105
    %v336 = vpop.f32.mrf.mxu0
    %v337 = vadd.f32 0.0, %v336
    %338 = vdwg.mxu0
    %340 = vset.pattern.permute.xlu0 0
    %341 = vperm.xlu0 %340, %v29
    %v342 = vpop.permute.xlu0 %341
    %345 = vset.pattern.permute.xlu0 0
    %346 = vperm.xlu0 %345, %v30
    %v347 = vpop.permute.xlu0 %346
    %350 = vset.pattern.permute.xlu0 0
    %351 = vperm.xlu0 %350, %v31
    %v352 = vpop.permute.xlu0 %351
    %355 = vset.pattern.permute.xlu0 0
    %356 = vperm.xlu0 %355, %v32
    %v357 = vpop.permute.xlu0 %356
    %v359 = vadd.f32 %v125, %v342
    %v360 = vadd.f32 %v128, %v347
    %v361 = vadd.f32 %v131, %v352
    %v362 = vadd.f32 %v134, %v357
    %vm363 = vcmp.eq.s32.totalorder %v33, 0
    %v364 = vsel %vm363, 1, 0
    %v365 = vperm.slane %v364, 0
    %vm366 = vcmp.eq.s32.totalorder %v365, 1
    %v367 = vsel %vm366, %v359, 0.0
    %v368 = vsel %vm366, %v360, 0.0
    %v369 = vsel %vm366, %v361, 0.0
    %v370 = vsel %vm366, %v362, 0.0
    %v371 = vmax.f32 %v359, %v360
    %v372 = vmax.f32 %v361, %v362
    %v373 = vmax.f32 %v371, %v372
    %v374 = vrot.slane %v373, 4
    %v375 = vmax.f32 %v373, %v374
    %v376 = vrot.slane %v375, 2
    %v377 = vmax.f32 %v375, %v376
    %v378 = vrot.slane %v377, 1
    %v379 = vmax.f32 %v377, %v378
    %v380 = vsub.f32 %v359, %v379
    %v381 = vsub.f32 %v360, %v379
    %v382 = vsub.f32 %v361, %v379
    %v383 = vsub.f32 %v362, %v379
    %v384 = vmul.f32 %v380, 1.442695
    %v385 = vpow.pop %v384
    %v386 = vmul.f32 %v381, 1.442695
    %v387 = vpow.pop %v386
    %v388 = vmul.f32 %v382, 1.442695
    %v389 = vpow.pop %v388
    %v390 = vmul.f32 %v383, 1.442695
    %v391 = vpow.pop %v390
    %vm392 = vcmask 261120
    %v394 = vsel %vm392, %v25, 0
    %v397 = vsel %vm392, %v26, 0
    %v400 = vsel %vm392, %v27, 0
    %v403 = vsel %vm392, %v28, 0
    %405 = vmatpush.msra.mxu0 0.0
    %406 = vmatpush.msra.mxu0 0.0
    %407 = vmatpush.msra.mxu0 0.0
    %408 = vmatpush.msra.mxu0 0.0
    %409 = vmatpush.msra.mxu0 0.0
    %410 = vmatpush.msra.mxu0 0.0
    %411 = vmatpush.msra.mxu0 0.0
    %412 = vmatpush.msra.mxu0 0.0
    %413 = vmatpush.msra.mxu0 0.0
    %414 = vmatpush.msra.mxu0 0.0
    %415 = vmatpush.msra.mxu0 0.0
    %416 = vmatpush.msra.mxu0 0.0
    %417 = vmatpush.msra.mxu0 %v391
    %418 = vmatpush.msra.mxu0 %v389
    %419 = vmatpush.msra.mxu0 %v387
    %420 = vmatpush.msra.mxu0 %v385
    %421 = vmatmul.f32.gmra.mxu0 %v394
    %v422 = vpop.f32.mrf.mxu0
    %v423 = vadd.f32 0.0, %v422
    %424 = vmatmul.f32.gmra.mxu0 %v397
    %v425 = vpop.f32.mrf.mxu0
    %v426 = vadd.f32 0.0, %v425
    %427 = vmatmul.f32.gmra.mxu0 %v400
    %v428 = vpop.f32.mrf.mxu0
    %v429 = vadd.f32 0.0, %v428
    %430 = vmatmul.f32.gmra.mxu0 %v403
    %v431 = vpop.f32.mrf.mxu0
    %v432 = vadd.f32 0.0, %v431
    %433 = vdwg.mxu0
    %v434 = vlog2.pop %v423
    %v435 = vmul.f32 %v434, 0.6931472
    %v436 = vlog2.pop %v426
    %v437 = vmul.f32 %v436, 0.6931472
    %v438 = vlog2.pop %v429
    %v439 = vmul.f32 %v438, 0.6931472
    %v440 = vlog2.pop %v432
    %v441 = vmul.f32 %v440, 0.6931472
    %v442 = vadd.f32 %v435, %v379
    %v443 = vadd.f32 %v437, %v379
    %v444 = vadd.f32 %v439, %v379
    %v445 = vadd.f32 %v441, %v379
    %v446 = vadd.f32 %v154, %v442
    %v447 = vadd.f32 %v157, %v443
    %v448 = vadd.f32 %v160, %v444
    %v449 = vadd.f32 %v163, %v445
    %vm450 = vcmp.eq.s32.totalorder %v33, 1
    %v451 = vsel %vm450, 1, 0
    %v452 = vperm.slane %v451, 0
    %vm453 = vcmp.eq.s32.totalorder %v452, 1
    %v454 = vsel %vm453, %v446, %v367
    %v455 = vsel %vm453, %v447, %v368
    %v456 = vsel %vm453, %v448, %v369
    %v457 = vsel %vm453, %v449, %v370
    %v458 = vmax.f32 %v446, %v447
    %v459 = vmax.f32 %v448, %v449
    %v460 = vmax.f32 %v458, %v459
    %v461 = vrot.slane %v460, 4
    %v462 = vmax.f32 %v460, %v461
    %v463 = vrot.slane %v462, 2
    %v464 = vmax.f32 %v462, %v463
    %v465 = vrot.slane %v464, 1
    %v466 = vmax.f32 %v464, %v465
    %v467 = vsub.f32 %v446, %v466
    %v468 = vsub.f32 %v447, %v466
    %v469 = vsub.f32 %v448, %v466
    %v470 = vsub.f32 %v449, %v466
    %v471 = vmul.f32 %v467, 1.442695
    %v472 = vpow.pop %v471
    %v473 = vmul.f32 %v468, 1.442695
    %v474 = vpow.pop %v473
    %v475 = vmul.f32 %v469, 1.442695
    %v476 = vpow.pop %v475
    %v477 = vmul.f32 %v470, 1.442695
    %v478 = vpow.pop %v477
    %479 = vmatpush.msra.mxu0 0.0
    %480 = vmatpush.msra.mxu0 0.0
    %481 = vmatpush.msra.mxu0 0.0
    %482 = vmatpush.msra.mxu0 0.0
    %483 = vmatpush.msra.mxu0 0.0
    %484 = vmatpush.msra.mxu0 0.0
    %485 = vmatpush.msra.mxu0 0.0
    %486 = vmatpush.msra.mxu0 0.0
    %487 = vmatpush.msra.mxu0 0.0
    %488 = vmatpush.msra.mxu0 0.0
    %489 = vmatpush.msra.mxu0 0.0
    %490 = vmatpush.msra.mxu0 0.0
    %491 = vmatpush.msra.mxu0 %v478
    %492 = vmatpush.msra.mxu0 %v476
    %493 = vmatpush.msra.mxu0 %v474
    %494 = vmatpush.msra.mxu0 %v472
    %495 = vmatmul.f32.gmra.mxu0 %v394
    %v496 = vpop.f32.mrf.mxu0
    %v497 = vadd.f32 0.0, %v496
    %498 = vmatmul.f32.gmra.mxu0 %v397
    %v499 = vpop.f32.mrf.mxu0
    %v500 = vadd.f32 0.0, %v499
    %501 = vmatmul.f32.gmra.mxu0 %v400
    %v502 = vpop.f32.mrf.mxu0
    %v503 = vadd.f32 0.0, %v502
    %504 = vmatmul.f32.gmra.mxu0 %v403
    %v505 = vpop.f32.mrf.mxu0
    %v506 = vadd.f32 0.0, %v505
    %507 = vdwg.mxu0
    %v508 = vlog2.pop %v497
    %v509 = vmul.f32 %v508, 0.6931472
    %v510 = vlog2.pop %v500
    %v511 = vmul.f32 %v510, 0.6931472
    %v512 = vlog2.pop %v503
    %v513 = vmul.f32 %v512, 0.6931472
    %v514 = vlog2.pop %v506
    %v515 = vmul.f32 %v514, 0.6931472
    %v516 = vadd.f32 %v509, %v466
    %v517 = vadd.f32 %v511, %v466
    %v518 = vadd.f32 %v513, %v466
    %v519 = vadd.f32 %v515, %v466
    %v520 = vadd.f32 %v183, %v516
    %v521 = vadd.f32 %v186, %v517
    %v522 = vadd.f32 %v189, %v518
    %v523 = vadd.f32 %v192, %v519
    %vm524 = vcmp.eq.s32.totalorder %v33, 2
    %v525 = vsel %vm524, 1, 0
    %v526 = vperm.slane %v525, 0
    %vm527 = vcmp.eq.s32.totalorder %v526, 1
    %v528 = vsel %vm527, %v520, %v454
    %v529 = vsel %vm527, %v521, %v455
    %v530 = vsel %vm527, %v522, %v456
    %v531 = vsel %vm527, %v523, %v457
    %v532 = vmax.f32 %v520, %v521
    %v533 = vmax.f32 %v522, %v523
    %v534 = vmax.f32 %v532, %v533
    %v535 = vrot.slane %v534, 4
    %v536 = vmax.f32 %v534, %v535
    %v537 = vrot.slane %v536, 2
    %v538 = vmax.f32 %v536, %v537
    %v539 = vrot.slane %v538, 1
    %v540 = vmax.f32 %v538, %v539
    %v541 = vsub.f32 %v520, %v540
    %v542 = vsub.f32 %v521, %v540
    %v543 = vsub.f32 %v522, %v540
    %v544 = vsub.f32 %v523, %v540
    %v545 = vmul.f32 %v541, 1.442695
    %v546 = vpow.pop %v545
    %v547 = vmul.f32 %v542, 1.442695
    %v548 = vpow.pop %v547
    %v549 = vmul.f32 %v543, 1.442695
    %v550 = vpow.pop %v549
    %v551 = vmul.f32 %v544, 1.442695
    %v552 = vpow.pop %v551
    %553 = vmatpush.msra.mxu0 0.0
    %554 = vmatpush.msra.mxu0 0.0
    %555 = vmatpush.msra.mxu0 0.0
    %556 = vmatpush.msra.mxu0 0.0
    %557 = vmatpush.msra.mxu0 0.0
    %558 = vmatpush.msra.mxu0 0.0
    %559 = vmatpush.msra.mxu0 0.0
    %560 = vmatpush.msra.mxu0 0.0
    %561 = vmatpush.msra.mxu0 0.0
    %562 = vmatpush.msra.mxu0 0.0
    %563 = vmatpush.msra.mxu0 0.0
    %564 = vmatpush.msra.mxu0 0.0
    %565 = vmatpush.msra.mxu0 %v552
    %566 = vmatpush.msra.mxu0 %v550
    %567 = vmatpush.msra.mxu0 %v548
    %568 = vmatpush.msra.mxu0 %v546
    %569 = vmatmul.f32.gmra.mxu0 %v394
    %v570 = vpop.f32.mrf.mxu0
    %v571 = vadd.f32 0.0, %v570
    %572 = vmatmul.f32.gmra.mxu0 %v397
    %v573 = vpop.f32.mrf.mxu0
    %v574 = vadd.f32 0.0, %v573
    %575 = vmatmul.f32.gmra.mxu0 %v400
    %v576 = vpop.f32.mrf.mxu0
    %v577 = vadd.f32 0.0, %v576
    %578 = vmatmul.f32.gmra.mxu0 %v403
    %v579 = vpop.f32.mrf.mxu0
    %v580 = vadd.f32 0.0, %v579
    %581 = vdwg.mxu0
    %v582 = vlog2.pop %v571
    %v583 = vmul.f32 %v582, 0.6931472
    %v584 = vlog2.pop %v574
    %v585 = vmul.f32 %v584, 0.6931472
    %v586 = vlog2.pop %v577
    %v587 = vmul.f32 %v586, 0.6931472
    %v588 = vlog2.pop %v580
    %v589 = vmul.f32 %v588, 0.6931472
    %v590 = vadd.f32 %v583, %v540
    %v591 = vadd.f32 %v585, %v540
    %v592 = vadd.f32 %v587, %v540
    %v593 = vadd.f32 %v589, %v540
    %v594 = vadd.f32 %v212, %v590
    %v595 = vadd.f32 %v215, %v591
    %v596 = vadd.f32 %v218, %v592
    %v597 = vadd.f32 %v221, %v593
    %vm598 = vcmp.eq.s32.totalorder %v33, 3
    %v599 = vsel %vm598, 1, 0
    %v600 = vperm.slane %v599, 0
    %vm601 = vcmp.eq.s32.totalorder %v600, 1
    %v602 = vsel %vm601, %v594, %v528
    %v603 = vsel %vm601, %v595, %v529
    %v604 = vsel %vm601, %v596, %v530
    %v605 = vsel %vm601, %v597, %v531
    %v606 = vmax.f32 %v594, %v595
    %v607 = vmax.f32 %v596, %v597
    %v608 = vmax.f32 %v606, %v607
    %v609 = vrot.slane %v608, 4
    %v610 = vmax.f32 %v608, %v609
    %v611 = vrot.slane %v610, 2
    %v612 = vmax.f32 %v610, %v611
    %v613 = vrot.slane %v612, 1
    %v614 = vmax.f32 %v612, %v613
    %v615 = vsub.f32 %v594, %v614
    %v616 = vsub.f32 %v595, %v614
    %v617 = vsub.f32 %v596, %v614
    %v618 = vsub.f32 %v597, %v614
    %v619 = vmul.f32 %v615, 1.442695
    %v620 = vpow.pop %v619
    %v621 = vmul.f32 %v616, 1.442695
    %v622 = vpow.pop %v621
    %v623 = vmul.f32 %v617, 1.442695
    %v624 = vpow.pop %v623
    %v625 = vmul.f32 %v618, 1.442695
    %v626 = vpow.pop %v625
    %627 = vmatpush.msra.mxu0 0.0
    %628 = vmatpush.msra.mxu0 0.0
    %629 = vmatpush.msra.mxu0 0.0
    %630 = vmatpush.msra.mxu0 0.0
    %631 = vmatpush.msra.mxu0 0.0
    %632 = vmatpush.msra.mxu0 0.0
    %633 = vmatpush.msra.mxu0 0.0
    %634 = vmatpush.msra.mxu0 0.0
    %635 = vmatpush.msra.mxu0 0.0
    %636 = vmatpush.msra.mxu0 0.0
    %637 = vmatpush.msra.mxu0 0.0
    %638 = vmatpush.msra.mxu0 0.0
    %639 = vmatpush.msra.mxu0 %v626
    %640 = vmatpush.msra.mxu0 %v624
    %641 = vmatpush.msra.mxu0 %v622
    %642 = vmatpush.msra.mxu0 %v620
    %643 = vmatmul.f32.gmra.mxu0 %v394
    %v644 = vpop.f32.mrf.mxu0
    %v645 = vadd.f32 0.0, %v644
    %646 = vmatmul.f32.gmra.mxu0 %v397
    %v647 = vpop.f32.mrf.mxu0
    %v648 = vadd.f32 0.0, %v647
    %649 = vmatmul.f32.gmra.mxu0 %v400
    %v650 = vpop.f32.mrf.mxu0
    %v651 = vadd.f32 0.0, %v650
    %652 = vmatmul.f32.gmra.mxu0 %v403
    %v653 = vpop.f32.mrf.mxu0
    %v654 = vadd.f32 0.0, %v653
    %655 = vdwg.mxu0
    %v656 = vlog2.pop %v645
    %v657 = vmul.f32 %v656, 0.6931472
    %v658 = vlog2.pop %v648
    %v659 = vmul.f32 %v658, 0.6931472
    %v660 = vlog2.pop %v651
    %v661 = vmul.f32 %v660, 0.6931472
    %v662 = vlog2.pop %v654
    %v663 = vmul.f32 %v662, 0.6931472
    %v664 = vadd.f32 %v657, %v614
    %v665 = vadd.f32 %v659, %v614
    %v666 = vadd.f32 %v661, %v614
    %v667 = vadd.f32 %v663, %v614
    %v668 = vadd.f32 %v241, %v664
    %v669 = vadd.f32 %v244, %v665
    %v670 = vadd.f32 %v247, %v666
    %v671 = vadd.f32 %v250, %v667
    %vm672 = vcmp.eq.s32.totalorder %v33, 4
    %v673 = vsel %vm672, 1, 0
    %v674 = vperm.slane %v673, 0
    %vm675 = vcmp.eq.s32.totalorder %v674, 1
    %v676 = vsel %vm675, %v668, %v602
    %v677 = vsel %vm675, %v669, %v603
    %v678 = vsel %vm675, %v670, %v604
    %v679 = vsel %vm675, %v671, %v605
    %v680 = vmax.f32 %v668, %v669
    %v681 = vmax.f32 %v670, %v671
    %v682 = vmax.f32 %v680, %v681
    %v683 = vrot.slane %v682, 4
    %v684 = vmax.f32 %v682, %v683
    %v685 = vrot.slane %v684, 2
    %v686 = vmax.f32 %v684, %v685
    %v687 = vrot.slane %v686, 1
    %v688 = vmax.f32 %v686, %v687
    %v689 = vsub.f32 %v668, %v688
    %v690 = vsub.f32 %v669, %v688
    %v691 = vsub.f32 %v670, %v688
    %v692 = vsub.f32 %v671, %v688
    %v693 = vmul.f32 %v689, 1.442695
    %v694 = vpow.pop %v693
    %v695 = vmul.f32 %v690, 1.442695
    %v696 = vpow.pop %v695
    %v697 = vmul.f32 %v691, 1.442695
    %v698 = vpow.pop %v697
    %v699 = vmul.f32 %v692, 1.442695
    %v700 = vpow.pop %v699
    %701 = vmatpush.msra.mxu0 0.0
    %702 = vmatpush.msra.mxu0 0.0
    %703 = vmatpush.msra.mxu0 0.0
    %704 = vmatpush.msra.mxu0 0.0
    %705 = vmatpush.msra.mxu0 0.0
    %706 = vmatpush.msra.mxu0 0.0
    %707 = vmatpush.msra.mxu0 0.0
    %708 = vmatpush.msra.mxu0 0.0
    %709 = vmatpush.msra.mxu0 0.0
    %710 = vmatpush.msra.mxu0 0.0
    %711 = vmatpush.msra.mxu0 0.0
    %712 = vmatpush.msra.mxu0 0.0
    %713 = vmatpush.msra.mxu0 %v700
    %714 = vmatpush.msra.mxu0 %v698
    %715 = vmatpush.msra.mxu0 %v696
    %716 = vmatpush.msra.mxu0 %v694
    %717 = vmatmul.f32.gmra.mxu0 %v394
    %v718 = vpop.f32.mrf.mxu0
    %v719 = vadd.f32 0.0, %v718
    %720 = vmatmul.f32.gmra.mxu0 %v397
    %v721 = vpop.f32.mrf.mxu0
    %v722 = vadd.f32 0.0, %v721
    %723 = vmatmul.f32.gmra.mxu0 %v400
    %v724 = vpop.f32.mrf.mxu0
    %v725 = vadd.f32 0.0, %v724
    %726 = vmatmul.f32.gmra.mxu0 %v403
    %v727 = vpop.f32.mrf.mxu0
    %v728 = vadd.f32 0.0, %v727
    %729 = vdwg.mxu0
    %v730 = vlog2.pop %v719
    %v731 = vmul.f32 %v730, 0.6931472
    %v732 = vlog2.pop %v722
    %v733 = vmul.f32 %v732, 0.6931472
    %v734 = vlog2.pop %v725
    %v735 = vmul.f32 %v734, 0.6931472
    %v736 = vlog2.pop %v728
    %v737 = vmul.f32 %v736, 0.6931472
    %v738 = vadd.f32 %v731, %v688
    %v739 = vadd.f32 %v733, %v688
    %v740 = vadd.f32 %v735, %v688
    %v741 = vadd.f32 %v737, %v688
    %v742 = vadd.f32 %v270, %v738
    %v743 = vadd.f32 %v273, %v739
    %v744 = vadd.f32 %v276, %v740
    %v745 = vadd.f32 %v279, %v741
    %vm746 = vcmp.eq.s32.totalorder %v33, 5
    %v747 = vsel %vm746, 1, 0
    %v748 = vperm.slane %v747, 0
    %vm749 = vcmp.eq.s32.totalorder %v748, 1
    %v750 = vsel %vm749, %v742, %v676
    %v751 = vsel %vm749, %v743, %v677
    %v752 = vsel %vm749, %v744, %v678
    %v753 = vsel %vm749, %v745, %v679
    %v754 = vmax.f32 %v742, %v743
    %v755 = vmax.f32 %v744, %v745
    %v756 = vmax.f32 %v754, %v755
    %v757 = vrot.slane %v756, 4
    %v758 = vmax.f32 %v756, %v757
    %v759 = vrot.slane %v758, 2
    %v760 = vmax.f32 %v758, %v759
    %v761 = vrot.slane %v760, 1
    %v762 = vmax.f32 %v760, %v761
    %v763 = vsub.f32 %v742, %v762
    %v764 = vsub.f32 %v743, %v762
    %v765 = vsub.f32 %v744, %v762
    %v766 = vsub.f32 %v745, %v762
    %v767 = vmul.f32 %v763, 1.442695
    %v768 = vpow.pop %v767
    %v769 = vmul.f32 %v764, 1.442695
    %v770 = vpow.pop %v769
    %v771 = vmul.f32 %v765, 1.442695
    %v772 = vpow.pop %v771
    %v773 = vmul.f32 %v766, 1.442695
    %v774 = vpow.pop %v773
    %775 = vmatpush.msra.mxu0 0.0
    %776 = vmatpush.msra.mxu0 0.0
    %777 = vmatpush.msra.mxu0 0.0
    %778 = vmatpush.msra.mxu0 0.0
    %779 = vmatpush.msra.mxu0 0.0
    %780 = vmatpush.msra.mxu0 0.0
    %781 = vmatpush.msra.mxu0 0.0
    %782 = vmatpush.msra.mxu0 0.0
    %783 = vmatpush.msra.mxu0 0.0
    %784 = vmatpush.msra.mxu0 0.0
    %785 = vmatpush.msra.mxu0 0.0
    %786 = vmatpush.msra.mxu0 0.0
    %787 = vmatpush.msra.mxu0 %v774
    %788 = vmatpush.msra.mxu0 %v772
    %789 = vmatpush.msra.mxu0 %v770
    %790 = vmatpush.msra.mxu0 %v768
    %791 = vmatmul.f32.gmra.mxu0 %v394
    %v792 = vpop.f32.mrf.mxu0
    %v793 = vadd.f32 0.0, %v792
    %794 = vmatmul.f32.gmra.mxu0 %v397
    %v795 = vpop.f32.mrf.mxu0
    %v796 = vadd.f32 0.0, %v795
    %797 = vmatmul.f32.gmra.mxu0 %v400
    %v798 = vpop.f32.mrf.mxu0
    %v799 = vadd.f32 0.0, %v798
    %800 = vmatmul.f32.gmra.mxu0 %v403
    %v801 = vpop.f32.mrf.mxu0
    %v802 = vadd.f32 0.0, %v801
    %803 = vdwg.mxu0
    %v804 = vlog2.pop %v793
    %v805 = vmul.f32 %v804, 0.6931472
    %v806 = vlog2.pop %v796
    %v807 = vmul.f32 %v806, 0.6931472
    %v808 = vlog2.pop %v799
    %v809 = vmul.f32 %v808, 0.6931472
    %v810 = vlog2.pop %v802
    %v811 = vmul.f32 %v810, 0.6931472
    %v812 = vadd.f32 %v805, %v762
    %v813 = vadd.f32 %v807, %v762
    %v814 = vadd.f32 %v809, %v762
    %v815 = vadd.f32 %v811, %v762
    %v816 = vadd.f32 %v299, %v812
    %v817 = vadd.f32 %v302, %v813
    %v818 = vadd.f32 %v305, %v814
    %v819 = vadd.f32 %v308, %v815
    %vm820 = vcmp.eq.s32.totalorder %v33, 6
    %v821 = vsel %vm820, 1, 0
    %v822 = vperm.slane %v821, 0
    %vm823 = vcmp.eq.s32.totalorder %v822, 1
    %v824 = vsel %vm823, %v816, %v750
    %v825 = vsel %vm823, %v817, %v751
    %v826 = vsel %vm823, %v818, %v752
    %v827 = vsel %vm823, %v819, %v753
    %v828 = vmax.f32 %v816, %v817
    %v829 = vmax.f32 %v818, %v819
    %v830 = vmax.f32 %v828, %v829
    %v831 = vrot.slane %v830, 4
    %v832 = vmax.f32 %v830, %v831
    %v833 = vrot.slane %v832, 2
    %v834 = vmax.f32 %v832, %v833
    %v835 = vrot.slane %v834, 1
    %v836 = vmax.f32 %v834, %v835
    %v837 = vsub.f32 %v816, %v836
    %v838 = vsub.f32 %v817, %v836
    %v839 = vsub.f32 %v818, %v836
    %v840 = vsub.f32 %v819, %v836
    %v841 = vmul.f32 %v837, 1.442695
    %v842 = vpow.pop %v841
    %v843 = vmul.f32 %v838, 1.442695
    %v844 = vpow.pop %v843
    %v845 = vmul.f32 %v839, 1.442695
    %v846 = vpow.pop %v845
    %v847 = vmul.f32 %v840, 1.442695
    %v848 = vpow.pop %v847
    %849 = vmatpush.msra.mxu0 0.0
    %850 = vmatpush.msra.mxu0 0.0
    %851 = vmatpush.msra.mxu0 0.0
    %852 = vmatpush.msra.mxu0 0.0
    %853 = vmatpush.msra.mxu0 0.0
    %854 = vmatpush.msra.mxu0 0.0
    %855 = vmatpush.msra.mxu0 0.0
    %856 = vmatpush.msra.mxu0 0.0
    %857 = vmatpush.msra.mxu0 0.0
    %858 = vmatpush.msra.mxu0 0.0
    %859 = vmatpush.msra.mxu0 0.0
    %860 = vmatpush.msra.mxu0 0.0
    %861 = vmatpush.msra.mxu0 %v848
    %862 = vmatpush.msra.mxu0 %v846
    %863 = vmatpush.msra.mxu0 %v844
    %864 = vmatpush.msra.mxu0 %v842
    %865 = vmatmul.f32.gmra.mxu0 %v394
    %v866 = vpop.f32.mrf.mxu0
    %v867 = vadd.f32 0.0, %v866
    %868 = vmatmul.f32.gmra.mxu0 %v397
    %v869 = vpop.f32.mrf.mxu0
    %v870 = vadd.f32 0.0, %v869
    %871 = vmatmul.f32.gmra.mxu0 %v400
    %v872 = vpop.f32.mrf.mxu0
    %v873 = vadd.f32 0.0, %v872
    %874 = vmatmul.f32.gmra.mxu0 %v403
    %v875 = vpop.f32.mrf.mxu0
    %v876 = vadd.f32 0.0, %v875
    %877 = vdwg.mxu0
    %v878 = vlog2.pop %v867
    %v879 = vmul.f32 %v878, 0.6931472
    %v880 = vlog2.pop %v870
    %v881 = vmul.f32 %v880, 0.6931472
    %v882 = vlog2.pop %v873
    %v883 = vmul.f32 %v882, 0.6931472
    %v884 = vlog2.pop %v876
    %v885 = vmul.f32 %v884, 0.6931472
    %v886 = vadd.f32 %v879, %v836
    %v887 = vadd.f32 %v881, %v836
    %v888 = vadd.f32 %v883, %v836
    %v889 = vadd.f32 %v885, %v836
    %v890 = vadd.f32 %v328, %v886
    %v891 = vadd.f32 %v331, %v887
    %v892 = vadd.f32 %v334, %v888
    %v893 = vadd.f32 %v337, %v889
    %vm894 = vcmp.eq.s32.totalorder %v33, 7
    %v895 = vsel %vm894, 1, 0
    %v896 = vperm.slane %v895, 0
    %vm897 = vcmp.eq.s32.totalorder %v896, 1
    %v898 = vsel %vm897, %v890, %v824
    %v899 = vsel %vm897, %v891, %v825
    %v900 = vsel %vm897, %v892, %v826
    %v901 = vsel %vm897, %v893, %v827
    %v902 = vmax.f32 %v898, %v899
    %v903 = vmax.f32 %v900, %v901
    %v904 = vmax.f32 %v902, %v903
    %v905 = vrot.slane %v904, 4
    %v906 = vmax.f32 %v904, %v905
    %v907 = vrot.slane %v906, 2
    %v908 = vmax.f32 %v906, %v907
    %v909 = vrot.slane %v908, 1
    %v910 = vmax.f32 %v908, %v909
    %v911 = vsub.f32 %v898, %v910
    %v912 = vsub.f32 %v899, %v910
    %v913 = vsub.f32 %v900, %v910
    %v914 = vsub.f32 %v901, %v910
    %v915 = vmul.f32 %v911, 1.442695
    %v916 = vpow.pop %v915
    %v917 = vmul.f32 %v912, 1.442695
    %v918 = vpow.pop %v917
    %v919 = vmul.f32 %v913, 1.442695
    %v920 = vpow.pop %v919
    %v921 = vmul.f32 %v914, 1.442695
    %v922 = vpow.pop %v921
    %v923 = vadd.f32 %v916, %v918
    %v924 = vadd.f32 %v923, %v920
    %v925 = vadd.f32 %v924, %v922
    %v926 = vrot.slane %v925, 4
    %v927 = vadd.f32 %v925, %v926
    %v928 = vrot.slane %v927, 2
    %v929 = vadd.f32 %v927, %v928
    %v930 = vrot.slane %v929, 1
    %v931 = vadd.f32 %v929, %v930
    %v932 = vlog2.pop %v931
    %v933 = vmul.f32 %v932, 0.6931472
    %v934 = vadd.f32 %v910, %v933
    %935 = vst [vmem:[#allocation2] sm:$0x1] %v934
    // Predicated region
    $region22: #{tpu_custom_call.1} parent=1 // pred_check
      _
    $region23: #{tpu_custom_call.1} parent=1 // pred_check_branch
      %937 = sbr.rel (0) target = $region25
    $region24: #{tpu_custom_call.1} parent=1 // pred_region
      %939 = vsyncadd [#allocation3], 0
      %s941 = sshll.u32 [#allocation2], 4
      %s942 = int_to_ptr.vmem [resolvable:$true] %s941
      %s943 = sshll.u32 %s5, 4
      %s944 = int_to_ptr.hbm [resolvable:$true] %s943
      %946 = dma.vmem_to_hbm [thread:$0]  %s942, 16, %s944, [#allocation3]
    $region25: #{tpu_custom_call.1} parent=1 // pred_fallthru
      _
    // Predicated region
    $region26: #{tpu_custom_call.1} parent=1 // pred_check
      _
    $region27: #{tpu_custom_call.1} parent=1 // pred_check_branch
      %948 = sbr.rel (0) target = $region29
    $region28: #{tpu_custom_call.1} parent=1 // pred_region
      %950 = dma.done [#allocation3], 16
    $region29: #{tpu_custom_call.1} parent=1 // pred_fallthru
      _
    %951 = vsyncpa [#allocation3], 1

</llo_original>
